<compile_context>
chip_gen: v6e
topology: v6e:2x2x1
jax: 0.10.0
libtpu: 0.0.40
codegen_flags: <defaults>
</compile_context>

<pallas_src>
import jax
import jax.numpy as jnp
from jax.experimental import pallas as pl
from jax.experimental.pallas import tpu as pltpu


def _masked_kernel(mask_ref, x_ref, o_ref):
    # mask_ref: (1, kk) lower-triangular mask row (flattened (k, k)).
    # x_ref / o_ref: (tb, kk) lane-dense block; each row is one flattened
    # (k, k) matrix for a (batch, head) pair.
    # Single broadcast multiply per element.
    o_ref[...] = x_ref[...] * mask_ref[...]


def make_mask(k: int, dtype=jnp.float32) -> jax.Array:
    # Deterministic parameter init:
    # torch.tril(torch.ones(k, k)).view(1, 1, k, k)
    return jnp.tril(jnp.ones((k, k), dtype=dtype))


def masked_forward(x: jax.Array, *, block_rows: int | None = None,
                   force_pallas: bool = False,
                   donate_input: bool = False) -> jax.Array:
    """x: (B, H, k, k). Returns x * tril(ones(k, k)) broadcast over (B, H)."""
    B, H, k1, k2 = x.shape
    assert k1 == k2, "Masked expects square (k, k) trailing dims"
    k = k1
    rows = B * H
    kk = k * k
    itemsize = jnp.dtype(x.dtype).itemsize

    mask2d = make_mask(k, x.dtype)

    lane_dense = (kk % 128 == 0)
    small_input = rows * kk * itemsize < (1 << 20)
    if not force_pallas and (small_input or not lane_dense):
        # Small inputs: launch/step overhead dominates -> let XLA fuse it.
        # Non-multiple-of-128 minor dim: standalone kernel would hit masked
        # partial stores; plain JAX avoids the silent regression.
        return x * mask2d.reshape(1, 1, k, k)

    # Lane-dense flattening: minor dim becomes k*k (256 for k=16).
    x_flat = x.reshape(rows, kk)
    mask_flat = mask2d.reshape(1, kk)

    if block_rows is None:
        # Target ~2 MiB per input block (so f32/kk=256 -> 2048 rows,
        # bf16 -> 4096 rows). Double-buffered in+out stays ~8 MiB.
        block_rows = max(8, ((2 << 20) // (kk * itemsize)) // 8 * 8)

    # Guarantee >=2 grid steps when rows >= 16 so the "parallel" grid axis has
    # work for both v7x TensorCores; tb stays a multiple of 8 sublanes.
    tb = min(block_rows, max(8, 8 * pl.cdiv(rows, 16)))
    grid = (pl.cdiv(rows, tb),)

    # Explicit VMEM budget: 2 double-buffered (tb, kk) streams + tiny mask,
    # plus headroom. Keeps v5e's 16 MiB scoped default from being the limiter
    # while staying well under v7x's 64 MiB physical VMEM.
    block_bytes = tb * kk * itemsize
    vmem_limit = int(min(48 << 20, max(16 << 20, 4 * block_bytes + (2 << 20))))

    out_flat = pl.pallas_call(
        _masked_kernel,
        out_shape=jax.ShapeDtypeStruct((rows, kk), x.dtype),
        grid=grid,
        in_specs=[
            # Mask: constant block index -> fetched once, reused every step.
            pl.BlockSpec((1, kk), lambda i: (0, 0)),
            # x: large lane-dense row blocks.
            pl.BlockSpec((tb, kk), lambda i: (i, 0)),
        ],
        out_specs=pl.BlockSpec((tb, kk), lambda i: (i, 0)),
        compiler_params=pltpu.CompilerParams(
            dimension_semantics=("parallel",),
            vmem_limit_bytes=vmem_limit,
        ),
        input_output_aliases={1: 0} if donate_input else {},
    )(mask_flat, x_flat)

    return out_flat.reshape(B, H, k, k)


if __name__ == "__main__":
    # Small shapes consistent with the module: x is (B, H, k, k).
    B, H, k = 2, 4, 16
    key = jax.random.PRNGKey(0)
    x = jax.random.normal(key, (B, H, k, k), dtype=jnp.float32)

    ref = x * make_mask(k, dtype=x.dtype).reshape(1, 1, k, k)

    # Exercise the Pallas kernel path explicitly (small inputs otherwise take
    # the fused-XLA fast path).
    out_pallas = jax.block_until_ready(masked_forward(x, force_pallas=True))
    assert out_pallas.shape == x.shape and out_pallas.dtype == x.dtype
    assert jnp.array_equal(out_pallas, ref)

    # Default wrapper path (small-input fast path) must agree as well.
    out_default = jax.block_until_ready(masked_forward(x))
    assert jnp.array_equal(out_default, ref)

    print("KERNEL_OK")
</pallas_src>

<mosaic_0001>
module attributes {stable_mosaic.version = 11 : i64} {
  func.func @_masked_kernel(%arg0: i32, %arg1: memref<1x256xf32, #tpu.memory_space<vmem>>, %arg2: memref<8x256xf32, #tpu.memory_space<vmem>>, %arg3: memref<8x256xf32, #tpu.memory_space<vmem>>) attributes {dimension_semantics = [#tpu.dimension_semantics<parallel>], iteration_bounds = array<i64: 1>, scalar_prefetch = 0 : i64, scratch_operands = 0 : i64, tpu.core_type = #tpu.core_type<tc>, window_params = [{pipeline_mode = #tpu.pipeline_mode<synchronous>, transform_indices = @transform_0, window_bounds = array<i64: 1, 256>}, {transform_indices = @transform_1, window_bounds = array<i64: 8, 256>}, {transform_indices = @transform_2, window_bounds = array<i64: 8, 256>}]} {
    %c0 = arith.constant 0 : index
    %c0_0 = arith.constant 0 : index
    %0 = vector.load %arg2[%c0, %c0_0] : memref<8x256xf32, #tpu.memory_space<vmem>>, vector<8x256xf32>
    %c0_1 = arith.constant 0 : index
    %c0_2 = arith.constant 0 : index
    %1 = vector.load %arg1[%c0_1, %c0_2] : memref<1x256xf32, #tpu.memory_space<vmem>>, vector<1x256xf32>
    %2 = vector.broadcast %1 : vector<1x256xf32> to vector<8x256xf32>
    %3 = arith.mulf %0, %2 : vector<8x256xf32>
    %c0_3 = arith.constant 0 : index
    %c0_4 = arith.constant 0 : index
    %4 = vector.load %arg3[%c0_3, %c0_4] : memref<8x256xf32, #tpu.memory_space<vmem>>, vector<8x256xf32>
    tpu.vector_store %arg3[%c0_3, %c0_4], %3 {strides = array<i32>} : memref<8x256xf32, #tpu.memory_space<vmem>>, vector<8x256xf32>,
    return
  }
  func.func @transform_0(%arg0: i32) -> (i32, i32) {
    %c0_i32 = arith.constant 0 : i32
    %c0_i32_0 = arith.constant 0 : i32
    %c0_i32_1 = arith.constant 0 : i32
    return %c0_i32, %c0_i32_0 : i32, i32
  }
  func.func @transform_1(%arg0: i32) -> (i32, i32) {
    %c0_i32 = arith.constant 0 : i32
    %c0_i32_0 = arith.constant 0 : i32
    return %arg0, %c0_i32 : i32, i32
  }
  func.func @transform_2(%arg0: i32) -> (i32, i32) {
    %c0_i32 = arith.constant 0 : i32
    %c0_i32_0 = arith.constant 0 : i32
    return %arg0, %c0_i32 : i32, i32
  }
}

</mosaic_0001>

<llo_original>
// kernel: tpu_custom_call.1
$region0: #{tpu_custom_call.1}
  #allocation0 [shape = 'u32[]', space=smem, size = 0x4, offset = 0x4, fixed_abs, tag = 'smem constant byte address 0x4 - core index']
  #allocation1 [shape = 'u32[144,128]{1,0:T(1,128)}', space=vmem, size = 0x12000, scoped, tag = 'internal scratch']
  %s0 = inlined_call_operand.hbm [shape: f32[1,256], index: 0, kind: input, shape index: {}]
  %s1 = inlined_call_operand.hbm [shape: f32[8,256], index: 1, kind: input, shape index: {}]
  %s2 = inlined_call_operand.hbm [shape: f32[8,256], index: 2, kind: output, shape index: {}]
  %s3 = sld [smem:[#allocation0]]
  $region26: #{tpu_custom_call.1} parent=0
    _
  %s5 = ssub.s32 1, %s3
  %s6 = scalar_select 0, %s5, %s3
  $region1: #{tpu_custom_call.1} parent=0
    #allocation2 [shape = 'u8[1024]{0}', space=vmem, size = 0x400, scoped, tag = 'input window, operand 0, single buffered']
    #allocation3 [shape = 's32[1]{0}', space=sflag, size = 0x4, scoped, tag = 'scoped memory for tpu_custom_call.1']
    #allocation4 [shape = 's32[1]{0}', space=sflag, size = 0x4, scoped, tag = 'scoped memory for tpu_custom_call.1']
    #allocation5 [shape = 'u8[8192]{0}', space=vmem, size = 0x2000, scoped, tag = 'input window, operand 1, single buffered']
    #allocation6 [shape = 's32[1]{0}', space=sflag, size = 0x4, scoped, tag = 'scoped memory for tpu_custom_call.1']
    #allocation7 [shape = 'u8[8192]{0}', space=vmem, size = 0x2000, scoped, tag = 'output window, operand 0, single buffered']
    %7 = vsyncpa [#allocation3], 0
    %8 = vsyncpa [#allocation6], 0
    %9 = vsyncpa [#allocation4], 0
    // Predicated region
    $region2: #{tpu_custom_call.1} parent=1 // pred_check
      _
    $region3: #{tpu_custom_call.1} parent=1 // pred_check_branch
      %11 = sbr.rel (0) target = $region5
    $region4: #{tpu_custom_call.1} parent=1 // pred_region
      %s13 = ssub.s32 32, 32
      %14 = vsyncadd [#allocation3], %s13
      %s16 = sshll.u32 [#allocation2], 4
      %s17 = int_to_ptr.vmem [resolvable:$true] %s16
      %19 = dma.hbm_to_vmem [thread:$0]  %s0, 32, %s17, [#allocation3]
    $region5: #{tpu_custom_call.1} parent=1 // pred_fallthru
      _
    // Predicated region
    $region6: #{tpu_custom_call.1} parent=1 // pred_check
      _
    $region7: #{tpu_custom_call.1} parent=1 // pred_check_branch
      %21 = sbr.rel (0) target = $region9
    $region8: #{tpu_custom_call.1} parent=1 // pred_region
      %s23 = ssub.s32 256, 256
      %24 = vsyncadd [#allocation6], %s23
      %s26 = sshll.u32 [#allocation5], 4
      %s27 = int_to_ptr.vmem [resolvable:$true] %s26
      %29 = dma.hbm_to_vmem [thread:$0]  %s1, 256, %s27, [#allocation6]
    $region9: #{tpu_custom_call.1} parent=1 // pred_fallthru
      _
    // Predicated region
    $region10: #{tpu_custom_call.1} parent=1 // pred_check
      _
    $region11: #{tpu_custom_call.1} parent=1 // pred_check_branch
      %31 = sbr.rel (0) target = $region13
    $region12: #{tpu_custom_call.1} parent=1 // pred_region
      %32 = dma.done [#allocation3], 32
    $region13: #{tpu_custom_call.1} parent=1 // pred_fallthru
      _
    // Predicated region
    $region14: #{tpu_custom_call.1} parent=1 // pred_check
      _
    $region15: #{tpu_custom_call.1} parent=1 // pred_check_branch
      %34 = sbr.rel (0) target = $region17
    $region16: #{tpu_custom_call.1} parent=1 // pred_region
      %35 = dma.done [#allocation6], 256
    $region17: #{tpu_custom_call.1} parent=1 // pred_fallthru
      _
    %v36 = vld [vmem:[#allocation5] sm:$0xff]
    %v37 = vld [vmem:[#allocation5 + $0x8] sm:$0xff]
    %v38 = vld [vmem:[#allocation2] sm:$0x3]
    %v40 = vlaneseq
    %v41 = vshrl.u32 %v40, 7
    %v42 = vsub.s32 0, %v41
    %v43 = vrot.slane %v38, %v42
    %v44 = vlaneseq
    %v45 = vshrl.u32 %v44, 7
    %v46 = vsub.s32 1, %v45
    %v47 = vrot.slane %v38, %v46
    %v50 = vmul.f32 %v36, %v43
    %v51 = vmul.f32 %v37, %v47
    %52 = vst [vmem:[#allocation7] sm:$0xff] %v50
    %53 = vst [vmem:[#allocation7 + $0x8] sm:$0xff] %v51
    // Predicated region
    $region18: #{tpu_custom_call.1} parent=1 // pred_check
      _
    $region19: #{tpu_custom_call.1} parent=1 // pred_check_branch
      %55 = sbr.rel (0) target = $region21
    $region20: #{tpu_custom_call.1} parent=1 // pred_region
      %s57 = ssub.s32 256, 256
      %58 = vsyncadd [#allocation4], %s57
      %s60 = sshll.u32 [#allocation7], 4
      %s61 = int_to_ptr.vmem [resolvable:$true] %s60
      %63 = dma.vmem_to_hbm [thread:$0]  %s61, 256, %s2, [#allocation4]
    $region21: #{tpu_custom_call.1} parent=1 // pred_fallthru
      _
    // Predicated region
    $region22: #{tpu_custom_call.1} parent=1 // pred_check
      _
    $region23: #{tpu_custom_call.1} parent=1 // pred_check_branch
      %65 = sbr.rel (0) target = $region25
    $region24: #{tpu_custom_call.1} parent=1 // pred_region
      %66 = dma.done [#allocation4], 256
    $region25: #{tpu_custom_call.1} parent=1 // pred_fallthru
      _
    %67 = vsyncpa [#allocation3], 1
    %68 = vsyncpa [#allocation6], 1
    %69 = vsyncpa [#allocation4], 1

</llo_original>
